<compile_context>
chip_gen: v6e
topology: v6e:2x2x1
jax: 0.10.0
libtpu: 0.0.40
codegen_flags: <defaults>
</compile_context>

<pallas_src>
import math

import jax
import jax.numpy as jnp
from jax.experimental import pallas as pl
from jax.experimental.pallas import tpu as pltpu

ACT_BIT = 8
WEIGHT_BIT = 8
_ACT_N = float(2 ** (ACT_BIT - 1) - 1)   # 127.0
_W_N = float(2 ** (WEIGHT_BIT - 1) - 1)  # 127.0


def _vit_output_kernel(x_ref, res_ref, wq_ref, bint_ref, oscale_ref, o_ref):
    """One (TM, N) output tile of QuantLinear -> dequant -> (+ residual).

    x_ref      : (TM, K) int8 VMEM   pre-quantized activation tile
    res_ref    : (TM, N) f32  VMEM   residual tile (input_tensor)
    wq_ref     : (K, N)  int8/bf16   integer-valued quantized weight (resident)
    bint_ref   : (1, N)  f32  VMEM   integer-valued quantized bias (bias_bit=32)
    oscale_ref : (1, N)  f32  VMEM   dequant scale = act_scale * weight_scale
    o_ref      : (TM, N) f32  VMEM   output tile
    """
    if wq_ref.dtype == jnp.int8:
        # Integer MXU path (v5e/v6e): exact int32 accumulation.
        acc = jnp.dot(x_ref[...], wq_ref[...],
                      preferred_element_type=jnp.int32).astype(jnp.float32)
    else:
        # bf16 MXU path (v7x / fallback): int8-range values are exact in bf16,
        # f32 accumulation matches the reference float matmul.
        acc = jnp.dot(x_ref[...].astype(jnp.bfloat16), wq_ref[...],
                      preferred_element_type=jnp.float32)
    # dequant + dropout (eval -> identity) + residual add
    o_ref[...] = (acc + bint_ref[...]) * oscale_ref[...] + res_ref[...]


def _chip_supports_int8_mxu():
    """True only for generations with an integer MXU (v5e/v6e)."""
    try:
        kind = jax.devices()[0].device_kind.lower()
    except Exception:
        return False
    if "v7" in kind:
        return False
    return ("v5" in kind) or ("v6" in kind)


def _vmem_capacity_bytes():
    try:
        return int(pltpu.get_tpu_info().vmem_capacity_bytes)
    except Exception:
        return 64 * 1024 * 1024  # conservative (v7x-sized) fallback


def quantized_vit_output(hidden_states, input_tensor, weight, bias, *,
                         tm=512, use_int8_mxu=None):
    """hidden_states: (B, S, I) f32, input_tensor: (B, S, H) f32,
    weight: (H, I) f32 (PyTorch Linear convention), bias: (H,) f32."""
    B, S, K = hidden_states.shape
    N = weight.shape[0]
    M = B * S

    if use_int8_mxu is None:
        use_int8_mxu = _chip_supports_int8_mxu()

    x2d = hidden_states.reshape(M, K).astype(jnp.float32)
    res2d = input_tensor.reshape(M, N).astype(jnp.float32)

    # --- QuantAct: GLOBAL per-tensor symmetric 8-bit scale, quantize x once --
    # Fused with the abs-max pass that already reads all of x; the kernel then
    # streams int8 (biggest HBM lever on v6e/v7x).
    max_abs = jnp.maximum(jnp.max(jnp.abs(x2d)), 1e-8)
    act_scale = max_abs / _ACT_N
    x_q = jnp.clip(jnp.round(x2d / act_scale), -_ACT_N - 1.0, _ACT_N)
    x_q = x_q.astype(jnp.int8)                                        # (M, K)

    # --- Per-output-channel symmetric 8-bit weight quantization (once) ------
    w_maxabs = jnp.maximum(jnp.max(jnp.abs(weight), axis=1, keepdims=True), 1e-8)
    w_scale = (w_maxabs / _W_N).astype(jnp.float32)                   # (N, 1)
    w_int = jnp.clip(jnp.round(weight / w_scale), -_W_N - 1.0, _W_N)  # (N, K)

    out_scale = (act_scale * w_scale.T).astype(jnp.float32)           # (1, N)
    # bias_bit=32 -> clamp is a no-op; quantize once here, not per tile.
    b_int = jnp.round(bias.reshape(1, N).astype(jnp.float32) / out_scale)

    # --- Generation-aware VMEM budget (also used as vmem_limit_bytes) -------
    budget = int(_vmem_capacity_bytes() * 0.6)

    def _run(int8_path, single_buffer_resident):
        w_dtype = jnp.int8 if int8_path else jnp.bfloat16
        w_bytes = 1 if int8_path else 2
        wq_t = w_int.T.astype(w_dtype)                                # (K, N)

        # Working set: streamed double-buffers + single-buffered residents +
        # in-kernel temporaries (bf16 upcast of x + f32/i32 accumulators).
        def working_set(rows):
            stream = 2 * rows * K * 1            # int8 x tile, double-buffered
            stream += 2 * 2 * rows * N * 4       # residual + output, f32, 2x buf
            resident = K * N * w_bytes + 2 * N * 4
            temps = rows * K * 2 + 2 * rows * N * 4
            return stream + resident + temps

        # MXU-aligned tile choice: multiples of 256, floor 128; clamp applied
        # unconditionally (even when tm >= M).
        TM = min(tm, M)
        if TM < M:
            TM = min(M, max(128, (TM // 256) * 256))
        while TM > 128 and working_set(TM) > budget:
            TM = max(128, ((TM - 256) // 128) * 128)
        grid = (pl.cdiv(M, TM),)

        resident_kwargs = (
            dict(pipeline_mode=pl.Buffered(1)) if single_buffer_resident else {})

        return pl.pallas_call(
            _vit_output_kernel,
            out_shape=jax.ShapeDtypeStruct((M, N), jnp.float32),
            grid=grid,
            in_specs=[
                pl.BlockSpec((TM, K), lambda i: (i, 0)),               # x int8
                pl.BlockSpec((TM, N), lambda i: (i, 0)),               # residual
                pl.BlockSpec((K, N), lambda i: (0, 0), **resident_kwargs),  # weight
                pl.BlockSpec((1, N), lambda i: (0, 0), **resident_kwargs),  # bias_int
                pl.BlockSpec((1, N), lambda i: (0, 0), **resident_kwargs),  # out_scale
            ],
            out_specs=pl.BlockSpec((TM, N), lambda i: (i, 0)),
            compiler_params=pltpu.CompilerParams(
                dimension_semantics=("parallel",),   # shard M tiles across TCs (v7x)
                vmem_limit_bytes=budget,
            ),
            cost_estimate=pl.CostEstimate(
                flops=2 * M * K * N,
                transcendentals=0,
                bytes_accessed=M * K + 2 * M * N * 4 + K * N * w_bytes + 2 * N * 4,
            ),
        )(x_q, res2d, wq_t, b_int, out_scale)

    # Preferred config first; degrade gracefully if a path does not lower on
    # this TPU generation (e.g. no integer MXU, or single-buffering rejected).
    configs = ([(True, True), (True, False)] if use_int8_mxu else [])
    configs += [(False, True), (False, False)]
    out2d, last_err = None, None
    for int8_path, single_buf in configs:
        try:
            out2d = _run(int8_path, single_buf)
            break
        except Exception as err:  # pragma: no cover - per-generation fallback
            last_err = err
            out2d = None
    if out2d is None:
        raise last_err

    return out2d.reshape(B, S, N)


def _reference(hidden_states, input_tensor, weight, bias):
    """Pure-JAX reference of the fused fake-quant forward (f32 everywhere)."""
    B, S, K = hidden_states.shape
    N = weight.shape[0]
    x = hidden_states.reshape(-1, K).astype(jnp.float32)
    max_abs = jnp.maximum(jnp.max(jnp.abs(x)), 1e-8)
    sx = max_abs / _ACT_N
    x_int = jnp.clip(jnp.round(x / sx), -_ACT_N - 1.0, _ACT_N)
    w_maxabs = jnp.maximum(jnp.max(jnp.abs(weight), axis=1, keepdims=True), 1e-8)
    ws = w_maxabs / _W_N
    w_int = jnp.clip(jnp.round(weight / ws), -_W_N - 1.0, _W_N)
    out_scale = sx * ws.T
    b_int = jnp.round(bias.reshape(1, N) / out_scale)
    acc = jax.lax.dot_general(x_int, w_int.T, (((1,), (0,)), ((), ())),
                              precision=jax.lax.Precision.HIGHEST,
                              preferred_element_type=jnp.float32)
    out = (acc + b_int) * out_scale + input_tensor.reshape(-1, N)
    return out.reshape(B, S, N)


if __name__ == "__main__":
    # Small but lane-aligned ViT-output shapes: batch=2, seq=128,
    # intermediate=256, hidden=128; tm=128 exercises a real multi-tile grid.
    B, S, I, H = 2, 128, 256, 128

    key = jax.random.PRNGKey(0)
    k_hs, k_res, k_w, k_b = jax.random.split(key, 4)

    hidden_states = jax.random.normal(k_hs, (B, S, I), dtype=jnp.float32)
    input_tensor = jax.random.normal(k_res, (B, S, H), dtype=jnp.float32)

    # Deterministic Linear(I -> H) params, PyTorch-style uniform(-1/sqrt(I), 1/sqrt(I)).
    bound = 1.0 / math.sqrt(I)
    weight = jax.random.uniform(k_w, (H, I), jnp.float32, -bound, bound)
    bias = jax.random.uniform(k_b, (H,), jnp.float32, -bound, bound)

    out = quantized_vit_output(hidden_states, input_tensor, weight, bias, tm=128)
    jax.block_until_ready(out)

    ref = _reference(hidden_states, input_tensor, weight, bias)
    assert out.shape == (B, S, H) and out.dtype == jnp.float32
    assert bool(jnp.allclose(out, ref, rtol=1e-3, atol=1e-3)), "mismatch vs reference"
    print("KERNEL_OK")
</pallas_src>

<mosaic_0001>
module attributes {stable_mosaic.version = 11 : i64} {
  func.func @_vit_output_kernel(%arg0: i32, %arg1: memref<128x256xi8, #tpu.memory_space<vmem>>, %arg2: memref<128x128xf32, #tpu.memory_space<vmem>>, %arg3: memref<256x128xbf16, #tpu.memory_space<vmem>>, %arg4: memref<1x128xf32, #tpu.memory_space<vmem>>, %arg5: memref<1x128xf32, #tpu.memory_space<vmem>>, %arg6: memref<128x128xf32, #tpu.memory_space<vmem>>) attributes {dimension_semantics = [#tpu.dimension_semantics<parallel>], iteration_bounds = array<i64: 2>, scalar_prefetch = 0 : i64, scratch_operands = 0 : i64, tpu.core_type = #tpu.core_type<tc>, window_params = [{transform_indices = @transform_0, window_bounds = array<i64: 128, 256>}, {transform_indices = @transform_1, window_bounds = array<i64: 128, 128>}, {pipeline_mode = #tpu.pipeline_mode<synchronous>, transform_indices = @transform_2, window_bounds = array<i64: 256, 128>}, {pipeline_mode = #tpu.pipeline_mode<synchronous>, transform_indices = @transform_3, window_bounds = array<i64: 1, 128>}, {pipeline_mode = #tpu.pipeline_mode<synchronous>, transform_indices = @transform_4, window_bounds = array<i64: 1, 128>}, {transform_indices = @transform_5, window_bounds = array<i64: 128, 128>}]} {
    %c0 = arith.constant 0 : index
    %c0_0 = arith.constant 0 : index
    %0 = vector.load %arg1[%c0, %c0_0] : memref<128x256xi8, #tpu.memory_space<vmem>>, vector<128x256xi8>
    %1 = arith.sitofp %0 : vector<128x256xi8> to vector<128x256xbf16>
    %c0_1 = arith.constant 0 : index
    %c0_2 = arith.constant 0 : index
    %2 = vector.load %arg3[%c0_1, %c0_2] : memref<256x128xbf16, #tpu.memory_space<vmem>>, vector<256x128xbf16>
    %cst = arith.constant dense<0.000000e+00> : vector<128x128xf32>
    %3 = tpu.matmul %1, %2, %cst {dimension_numbers = #tpu.dot_dimension_numbers<[1], [0], [0], [1], [0, 0, 1, 1], [], []>} : vector<128x256xbf16>, vector<256x128xbf16>, vector<128x128xf32> -> vector<128x128xf32>
    %c0_3 = arith.constant 0 : index
    %c0_4 = arith.constant 0 : index
    %4 = vector.load %arg4[%c0_3, %c0_4] : memref<1x128xf32, #tpu.memory_space<vmem>>, vector<1x128xf32>
    %5 = vector.broadcast %4 : vector<1x128xf32> to vector<128x128xf32>
    %6 = arith.addf %3, %5 : vector<128x128xf32>
    %c0_5 = arith.constant 0 : index
    %c0_6 = arith.constant 0 : index
    %7 = vector.load %arg5[%c0_5, %c0_6] : memref<1x128xf32, #tpu.memory_space<vmem>>, vector<1x128xf32>
    %8 = vector.broadcast %7 : vector<1x128xf32> to vector<128x128xf32>
    %9 = arith.mulf %6, %8 : vector<128x128xf32>
    %c0_7 = arith.constant 0 : index
    %c0_8 = arith.constant 0 : index
    %10 = vector.load %arg2[%c0_7, %c0_8] : memref<128x128xf32, #tpu.memory_space<vmem>>, vector<128x128xf32>
    %11 = arith.addf %9, %10 : vector<128x128xf32>
    %c0_9 = arith.constant 0 : index
    %c0_10 = arith.constant 0 : index
    %12 = vector.load %arg6[%c0_9, %c0_10] : memref<128x128xf32, #tpu.memory_space<vmem>>, vector<128x128xf32>
    tpu.vector_store %arg6[%c0_9, %c0_10], %11 {strides = array<i32>} : memref<128x128xf32, #tpu.memory_space<vmem>>, vector<128x128xf32>,
    return
  }
  func.func @transform_0(%arg0: i32) -> (i32, i32) {
    %c0_i32 = arith.constant 0 : i32
    %c0_i32_0 = arith.constant 0 : i32
    return %arg0, %c0_i32 : i32, i32
  }
  func.func @transform_1(%arg0: i32) -> (i32, i32) {
    %c0_i32 = arith.constant 0 : i32
    %c0_i32_0 = arith.constant 0 : i32
    return %arg0, %c0_i32 : i32, i32
  }
  func.func @transform_2(%arg0: i32) -> (i32, i32) {
    %c0_i32 = arith.constant 0 : i32
    %c0_i32_0 = arith.constant 0 : i32
    %c0_i32_1 = arith.constant 0 : i32
    return %c0_i32, %c0_i32_0 : i32, i32
  }
  func.func @transform_3(%arg0: i32) -> (i32, i32) {
    %c0_i32 = arith.constant 0 : i32
    %c0_i32_0 = arith.constant 0 : i32
    %c0_i32_1 = arith.constant 0 : i32
    return %c0_i32, %c0_i32_0 : i32, i32
  }
  func.func @transform_4(%arg0: i32) -> (i32, i32) {
    %c0_i32 = arith.constant 0 : i32
    %c0_i32_0 = arith.constant 0 : i32
    %c0_i32_1 = arith.constant 0 : i32
    return %c0_i32, %c0_i32_0 : i32, i32
  }
  func.func @transform_5(%arg0: i32) -> (i32, i32) {
    %c0_i32 = arith.constant 0 : i32
    %c0_i32_0 = arith.constant 0 : i32
    return %arg0, %c0_i32 : i32, i32
  }
}

module attributes {stable_mosaic.version = 11 : i64} {
  func.func @_vit_output_kernel(%arg0: i32, %arg1: memref<128x256xi8, #tpu.memory_space<vmem>>, %arg2: memref<128x128xf32, #tpu.memory_space<vmem>>, %arg3: memref<256x128xbf16, #tpu.memory_space<vmem>>, %arg4: memref<1x128xf32, #tpu.memory_space<vmem>>, %arg5: memref<1x128xf32, #tpu.memory_space<vmem>>, %arg6: memref<128x128xf32, #tpu.memory_space<vmem>>) attributes {dimension_semantics = [#tpu.dimension_semantics<parallel>], iteration_bounds = array<i64: 2>, scalar_prefetch = 0 : i64, scratch_operands = 0 : i64, tpu.core_type = #tpu.core_type<tc>, window_params = [{transform_indices = @transform_0, window_bounds = array<i64: 128, 256>}, {transform_indices = @transform_1, window_bounds = array<i64: 128, 128>}, {pipeline_mode = #tpu.pipeline_mode<synchronous>, transform_indices = @transform_2, window_bounds = array<i64: 256, 128>}, {pipeline_mode = #tpu.pipeline_mode<synchronous>, transform_indices = @transform_3, window_bounds = array<i64: 1, 128>}, {pipeline_mode = #tpu.pipeline_mode<synchronous>, transform_indices = @transform_4, window_bounds = array<i64: 1, 128>}, {transform_indices = @transform_5, window_bounds = array<i64: 128, 128>}]} {
    %c0 = arith.constant 0 : index
    %c0_0 = arith.constant 0 : index
    %0 = vector.load %arg1[%c0, %c0_0] : memref<128x256xi8, #tpu.memory_space<vmem>>, vector<128x256xi8>
    %1 = arith.sitofp %0 : vector<128x256xi8> to vector<128x256xbf16>
    %c0_1 = arith.constant 0 : index
    %c0_2 = arith.constant 0 : index
    %2 = vector.load %arg3[%c0_1, %c0_2] : memref<256x128xbf16, #tpu.memory_space<vmem>>, vector<256x128xbf16>
    %cst = arith.constant dense<0.000000e+00> : vector<128x128xf32>
    %3 = tpu.matmul %1, %2, %cst {dimension_numbers = #tpu.dot_dimension_numbers<[1], [0], [0], [1], [0, 0, 1, 1], [], []>} : vector<128x256xbf16>, vector<256x128xbf16>, vector<128x128xf32> -> vector<128x128xf32>
    %c0_3 = arith.constant 0 : index
    %c0_4 = arith.constant 0 : index
    %4 = vector.load %arg4[%c0_3, %c0_4] : memref<1x128xf32, #tpu.memory_space<vmem>>, vector<1x128xf32>
    %5 = vector.broadcast %4 : vector<1x128xf32> to vector<128x128xf32>
    %6 = arith.addf %3, %5 : vector<128x128xf32>
    %c0_5 = arith.constant 0 : index
    %c0_6 = arith.constant 0 : index
    %7 = vector.load %arg5[%c0_5, %c0_6] : memref<1x128xf32, #tpu.memory_space<vmem>>, vector<1x128xf32>
    %8 = vector.broadcast %7 : vector<1x128xf32> to vector<128x128xf32>
    %9 = arith.mulf %6, %8 : vector<128x128xf32>
    %c0_7 = arith.constant 0 : index
    %c0_8 = arith.constant 0 : index
    %10 = vector.load %arg2[%c0_7, %c0_8] : memref<128x128xf32, #tpu.memory_space<vmem>>, vector<128x128xf32>
    %11 = arith.addf %9, %10 : vector<128x128xf32>
    %c0_9 = arith.constant 0 : index
    %c0_10 = arith.constant 0 : index
    %12 = vector.load %arg6[%c0_9, %c0_10] : memref<128x128xf32, #tpu.memory_space<vmem>>, vector<128x128xf32>
    tpu.vector_store %arg6[%c0_9, %c0_10], %11 {strides = array<i32>} : memref<128x128xf32, #tpu.memory_space<vmem>>, vector<128x128xf32>,
    return
  }
  func.func @transform_0(%arg0: i32) -> (i32, i32) {
    %c0_i32 = arith.constant 0 : i32
    %c0_i32_0 = arith.constant 0 : i32
    return %arg0, %c0_i32 : i32, i32
  }
  func.func @transform_1(%arg0: i32) -> (i32, i32) {
    %c0_i32 = arith.constant 0 : i32
    %c0_i32_0 = arith.constant 0 : i32
    return %arg0, %c0_i32 : i32, i32
  }
  func.func @transform_2(%arg0: i32) -> (i32, i32) {
    %c0_i32 = arith.constant 0 : i32
    %c0_i32_0 = arith.constant 0 : i32
    %c0_i32_1 = arith.constant 0 : i32
    return %c0_i32, %c0_i32_0 : i32, i32
  }
  func.func @transform_3(%arg0: i32) -> (i32, i32) {
    %c0_i32 = arith.constant 0 : i32
    %c0_i32_0 = arith.constant 0 : i32
    %c0_i32_1 = arith.constant 0 : i32
    return %c0_i32, %c0_i32_0 : i32, i32
  }
  func.func @transform_4(%arg0: i32) -> (i32, i32) {
    %c0_i32 = arith.constant 0 : i32
    %c0_i32_0 = arith.constant 0 : i32
    %c0_i32_1 = arith.constant 0 : i32
    return %c0_i32, %c0_i32_0 : i32, i32
  }
  func.func @transform_5(%arg0: i32) -> (i32, i32) {
    %c0_i32 = arith.constant 0 : i32
    %c0_i32_0 = arith.constant 0 : i32
    return %arg0, %c0_i32 : i32, i32
  }
}

</mosaic_0001>

<llo_original>
// kernel: tpu_custom_call.1
$region0: #{tpu_custom_call.1}
  #allocation0 [shape = 'u32[]', space=smem, size = 0x4, offset = 0x4, fixed_abs, tag = 'smem constant byte address 0x4 - core index']
  #allocation1 [shape = 'u32[144,128]{1,0:T(1,128)}', space=vmem, size = 0x12000, scoped, tag = 'internal scratch']
  %s0 = inlined_call_operand.hbm [shape: s8[256,256], index: 0, kind: input, shape index: {}]
  %s1 = inlined_call_operand.hbm [shape: f32[256,128], index: 1, kind: input, shape index: {}]
  %s2 = inlined_call_operand.hbm [shape: bf16[256,128], index: 2, kind: input, shape index: {}]
  %s3 = inlined_call_operand.vmem [shape: f32[1,128], index: 3, kind: input, shape index: {}]
  %s4 = inlined_call_operand.vmem [shape: f32[1,128], index: 4, kind: input, shape index: {}]
  %s5 = inlined_call_operand.hbm [shape: f32[256,128], index: 5, kind: output, shape index: {}]
  %s6 = sld [smem:[#allocation0]]
  $region65: #{tpu_custom_call.1} parent=0
    _
  %s8 = ssub.s32 1, %s6
  %s9 = scalar_select 0, %s8, %s6
  $region1: #{tpu_custom_call.1} parent=0
    #allocation2 [shape = 'u8[65536]{0}', space=vmem, size = 0x10000, scoped, tag = 'input window, operand 0']
    #allocation3 [shape = 's32[2]{0}', space=sflag, size = 0x8, scoped, tag = 'scoped memory for tpu_custom_call.1']
    #allocation4 [shape = 's32[2]{0}', space=sflag, size = 0x8, scoped, tag = 'scoped memory for tpu_custom_call.1']
    #allocation5 [shape = 'u8[131072]{0}', space=vmem, size = 0x20000, scoped, tag = 'input window, operand 1']
    #allocation6 [shape = 's32[2]{0}', space=sflag, size = 0x8, scoped, tag = 'scoped memory for tpu_custom_call.1']
    #allocation7 [shape = 'u8[65536]{0}', space=vmem, size = 0x10000, scoped, tag = 'input window, operand 2, single buffered']
    #allocation8 [shape = 'u8[131072]{0}', space=vmem, size = 0x20000, scoped, tag = 'output window, operand 0']
    %10 = vsyncpa [#allocation3], 0
    %s11 = scalar_lea.sflag [#allocation3], 1
    %12 = vsyncpa %s11, 0
    %13 = vsyncpa [#allocation6], 0
    %s14 = scalar_lea.sflag [#allocation6], 1
    %15 = vsyncpa %s14, 0
    %16 = vsyncpa [#allocation4], 0
    %s17 = scalar_lea.sflag [#allocation4], 1
    %18 = vsyncpa %s17, 0
    loop: start=0, step=1, limit=4
    $region2: #{tpu_custom_call.1} parent=1 // loop_pre_header
      _
    $region3: #{tpu_custom_call.1} parent=1 // loop_header
      %s20 = sphi 0, %s24
      %p21 = scmp.ge.s32.totalorder %s20, 4
      %s30 = sphi 0, %s32
      %s33 = sphi 0, %s30
      %s34 = sphi 0, %s33
      %s50 = sphi 0, %s34
      %s56 = sphi 0, %s58
      %s59 = sphi 0, %s56
      %s60 = sphi 0, %s59
      %s76 = sphi 0, %s60
      %s80 = sphi 0, %s80
      %s82 = sphi 0, %s80
      %s83 = sphi 0, %s82
      %s97 = sphi 0, %s83
      %s101 = sphi 0, %s101
      %s103 = sphi 0, %s101
      %s104 = sphi 0, %s103
      %s118 = sphi 0, %s104
      %s122 = sphi 0, %s122
      %s124 = sphi 0, %s122
      %s125 = sphi 0, %s124
      %s139 = sphi 0, %s125
      %s145 = sphi 0, %s147
      %s148 = sphi 0, %s145
      %s149 = sphi 0, %s148
      %s165 = sphi 0, %s149
    $region4: #{tpu_custom_call.1} parent=1 // loop_header_branch
      %23 = sbr.rel (%p21) target = $region8
    $region5: #{tpu_custom_call.1} parent=1 // loop_body
      %s25 = ssub.s32 %s20, 1
      %s26 = ssub.s32 %s20, 2
      %s27 = sadd.s32 %s20, 1
      %s28 = ssub.s32 %s20, %s27
      %p29 = scmp.eq.s32.totalorder %s28, 0
      %s31 = sadd.s32 %s30, 1
      %s32 = scalar_select %p29, %s30, %s31
      %p35 = pneg %p29
      %p36 = scmp.eq.s32.totalorder %s20, 1
      %p37 = por %p35, %p36
      %p38 = scmp.ne.s32.totalorder %s30, %s33
      %p39 = scmp.eq.s32.totalorder %s20, 0
      %p40 = por %p38, %p39
      %p41 = scmp.ne.s32.totalorder %s30, %s33
      %p42 = scmp.eq.s32.totalorder %s25, 1
      %p43 = por %p41, %p42
      %p44 = scmp.ne.s32.totalorder %s33, %s34
      %p45 = scmp.eq.s32.totalorder %s25, 0
      %p46 = por %p44, %p45
      %p47 = scmp.ne.s32.totalorder %s33, %s34
      %p48 = scmp.eq.s32.totalorder %s26, 1
      %p49 = por %p47, %p48
      %p51 = scmp.ne.s32.totalorder %s34, %s50
      %p52 = scmp.eq.s32.totalorder %s26, 0
      %p53 = por %p51, %p52
      %s54 = ssub.s32 %s20, %s27
      %p55 = scmp.eq.s32.totalorder %s54, 0
      %s57 = sadd.s32 %s56, 1
      %s58 = scalar_select %p55, %s56, %s57
      %p61 = pneg %p55
      %p62 = scmp.eq.s32.totalorder %s20, 1
      %p63 = por %p61, %p62
      %p64 = scmp.ne.s32.totalorder %s56, %s59
      %p65 = scmp.eq.s32.totalorder %s20, 0
      %p66 = por %p64, %p65
      %p67 = scmp.ne.s32.totalorder %s56, %s59
      %p68 = scmp.eq.s32.totalorder %s25, 1
      %p69 = por %p67, %p68
      %p70 = scmp.ne.s32.totalorder %s59, %s60
      %p71 = scmp.eq.s32.totalorder %s25, 0
      %p72 = por %p70, %p71
      %p73 = scmp.ne.s32.totalorder %s59, %s60
      %p74 = scmp.eq.s32.totalorder %s26, 1
      %p75 = por %p73, %p74
      %p77 = scmp.ne.s32.totalorder %s60, %s76
      %p78 = scmp.eq.s32.totalorder %s26, 0
      %p79 = por %p77, %p78
      %s81 = sadd.s32 %s80, 1
      %p84 = scmp.eq.s32.totalorder %s20, 1
      %p85 = scmp.ne.s32.totalorder %s80, %s82
      %p86 = scmp.eq.s32.totalorder %s20, 0
      %p87 = por %p85, %p86
      %p88 = scmp.ne.s32.totalorder %s80, %s82
      %p89 = scmp.eq.s32.totalorder %s25, 1
      %p90 = por %p88, %p89
      %p91 = scmp.ne.s32.totalorder %s82, %s83
      %p92 = scmp.eq.s32.totalorder %s25, 0
      %p93 = por %p91, %p92
      %p94 = scmp.ne.s32.totalorder %s82, %s83
      %p95 = scmp.eq.s32.totalorder %s26, 1
      %p96 = por %p94, %p95
      %p98 = scmp.ne.s32.totalorder %s83, %s97
      %p99 = scmp.eq.s32.totalorder %s26, 0
      %p100 = por %p98, %p99
      %s102 = sadd.s32 %s101, 1
      %p105 = scmp.eq.s32.totalorder %s20, 1
      %p106 = scmp.ne.s32.totalorder %s101, %s103
      %p107 = scmp.eq.s32.totalorder %s20, 0
      %p108 = por %p106, %p107
      %p109 = scmp.ne.s32.totalorder %s101, %s103
      %p110 = scmp.eq.s32.totalorder %s25, 1
      %p111 = por %p109, %p110
      %p112 = scmp.ne.s32.totalorder %s103, %s104
      %p113 = scmp.eq.s32.totalorder %s25, 0
      %p114 = por %p112, %p113
      %p115 = scmp.ne.s32.totalorder %s103, %s104
      %p116 = scmp.eq.s32.totalorder %s26, 1
      %p117 = por %p115, %p116
      %p119 = scmp.ne.s32.totalorder %s104, %s118
      %p120 = scmp.eq.s32.totalorder %s26, 0
      %p121 = por %p119, %p120
      %s123 = sadd.s32 %s122, 1
      %p126 = scmp.eq.s32.totalorder %s20, 1
      %p127 = scmp.ne.s32.totalorder %s122, %s124
      %p128 = scmp.eq.s32.totalorder %s20, 0
      %p129 = por %p127, %p128
      %p130 = scmp.ne.s32.totalorder %s122, %s124
      %p131 = scmp.eq.s32.totalorder %s25, 1
      %p132 = por %p130, %p131
      %p133 = scmp.ne.s32.totalorder %s124, %s125
      %p134 = scmp.eq.s32.totalorder %s25, 0
      %p135 = por %p133, %p134
      %p136 = scmp.ne.s32.totalorder %s124, %s125
      %p137 = scmp.eq.s32.totalorder %s26, 1
      %p138 = por %p136, %p137
      %p140 = scmp.ne.s32.totalorder %s125, %s139
      %p141 = scmp.eq.s32.totalorder %s26, 0
      %p142 = por %p140, %p141
      %s143 = ssub.s32 %s20, %s27
      %p144 = scmp.eq.s32.totalorder %s143, 0
      %s146 = sadd.s32 %s145, 1
      %s147 = scalar_select %p144, %s145, %s146
      %p150 = pneg %p144
      %p151 = scmp.eq.s32.totalorder %s20, 1
      %p152 = por %p150, %p151
      %p153 = scmp.ne.s32.totalorder %s145, %s148
      %p154 = scmp.eq.s32.totalorder %s20, 0
      %p155 = por %p153, %p154
      %p156 = scmp.ne.s32.totalorder %s145, %s148
      %p157 = scmp.eq.s32.totalorder %s25, 1
      %p158 = por %p156, %p157
      %p159 = scmp.ne.s32.totalorder %s148, %s149
      %p160 = scmp.eq.s32.totalorder %s25, 0
      %p161 = por %p159, %p160
      %p162 = scmp.ne.s32.totalorder %s148, %s149
      %p163 = scmp.eq.s32.totalorder %s26, 1
      %p164 = por %p162, %p163
      %p166 = scmp.ne.s32.totalorder %s149, %s165
      %p167 = scmp.eq.s32.totalorder %s26, 0
      %p168 = por %p166, %p167
      %p169 = scmp.le.s32.totalorder 1, %s20
      %p170 = scmp.lt.s32.totalorder %s20, 3
      %p171 = pnand %p169, %p170
      %p172 = pneg %p171
      // Predicated region
      $region9: #{tpu_custom_call.1} parent=5 // pred_check
        _
      $region10: #{tpu_custom_call.1} parent=5 // pred_check_branch
        %174 = sbr.rel (%p171) target = $region12
      $region11: #{tpu_custom_call.1} parent=5 // pred_region
        %s175 = ssub.s32 %s20, 1
        // Predicated region
        $region13: #{tpu_custom_call.1} parent=11 // pred_check
          %p176 = pneg %p93
        $region14: #{tpu_custom_call.1} parent=11 // pred_check_branch
          %178 = sbr.rel (%p176) target = $region16
        $region15: #{tpu_custom_call.1} parent=11 // pred_region
          %s180 = ssub.s32 2048, 2048
          %181 = vsyncadd [#allocation6], %s180
          %s182 = sshll.u32 [#allocation7], 4
          %s183 = int_to_ptr.vmem [resolvable:$true] %s182
          %188 = dma.hbm_to_vmem [thread:$0]  %s2, 2048, %s183, [#allocation6], 64, 64, 4
        $region16: #{tpu_custom_call.1} parent=11 // pred_fallthru
          _
        // Predicated region
        $region17: #{tpu_custom_call.1} parent=11 // pred_check
          %p189 = pneg %p114
        $region18: #{tpu_custom_call.1} parent=11 // pred_check_branch
          %191 = sbr.rel (%p189) target = $region20
        $region19: #{tpu_custom_call.1} parent=11 // pred_region
          _
        $region20: #{tpu_custom_call.1} parent=11 // pred_fallthru
          _
        // Predicated region
        $region21: #{tpu_custom_call.1} parent=11 // pred_check
          %p192 = pneg %p135
        $region22: #{tpu_custom_call.1} parent=11 // pred_check_branch
          %194 = sbr.rel (%p192) target = $region24
        $region23: #{tpu_custom_call.1} parent=11 // pred_region
          _
        $region24: #{tpu_custom_call.1} parent=11 // pred_fallthru
          _
      $region12: #{tpu_custom_call.1} parent=5 // pred_fallthru
        _
      %p195 = scmp.lt.s32.totalorder %s20, 2
      // Predicated region
      $region25: #{tpu_custom_call.1} parent=5 // pred_check
        %p196 = pneg %p195
      $region26: #{tpu_custom_call.1} parent=5 // pred_check_branch
        %198 = sbr.rel (%p196) target = $region28
      $region27: #{tpu_custom_call.1} parent=5 // pred_region
        // Predicated region
        $region29: #{tpu_custom_call.1} parent=27 // pred_check
          %p199 = pneg %p40
        $region30: #{tpu_custom_call.1} parent=27 // pred_check_branch
          %201 = sbr.rel (%p199) target = $region32
        $region31: #{tpu_custom_call.1} parent=27 // pred_region
          %s202 = sand.u32 %s30, 1
          %s203 = scalar_lea.sflag [#allocation3], %s202
          %s204 = sand.u32 %s30, 1
          %s205 = smul.addr %s204, 64
          %s206 = scalar_lea.vmem [#allocation2], %s205
          %s207 = smul.u32 4, %s20
          %s209 = ssub.s32 1024, 1024
          %210 = vsyncadd %s203, %s209
          %s211 = smul.addr %s207, 2
          %s212 = smul.addr %s211, 128
          %s213 = scalar_lea.hbm %s0, %s212
          %s214 = sshll.u32 %s206, 4
          %s215 = int_to_ptr.vmem [resolvable:$true] %s214
          %220 = dma.hbm_to_vmem [thread:$0]  %s213, 1024, %s215, %s203, 256, 256, 16
        $region32: #{tpu_custom_call.1} parent=27 // pred_fallthru
          _
        // Predicated region
        $region33: #{tpu_custom_call.1} parent=27 // pred_check
          %p221 = pneg %p66
        $region34: #{tpu_custom_call.1} parent=27 // pred_check_branch
          %223 = sbr.rel (%p221) target = $region36
        $region35: #{tpu_custom_call.1} parent=27 // pred_region
          %s224 = sand.u32 %s20, 1
          %s225 = scalar_lea.sflag [#allocation6], %s224
          %s226 = sand.u32 %s56, 1
          %s227 = smul.addr %s226, 128
          %s228 = scalar_lea.vmem [#allocation5], %s227
          %s229 = smul.u32 16, %s20
          %s231 = ssub.s32 2048, 2048
          %232 = vsyncadd %s225, %s231
          %s233 = smul.addr %s229, 128
          %s234 = scalar_lea.hbm %s1, %s233
          %s235 = sshll.u32 %s228, 4
          %s236 = int_to_ptr.vmem [resolvable:$true] %s235
          %241 = dma.hbm_to_vmem [thread:$0]  %s234, 2048, %s236, %s225, 128, 128, 8
        $region36: #{tpu_custom_call.1} parent=27 // pred_fallthru
          _
      $region28: #{tpu_custom_call.1} parent=5 // pred_fallthru
        _
      %p242 = scmp.le.s32.totalorder 1, %s20
      %p243 = scmp.lt.s32.totalorder %s20, 3
      %p244 = pnand %p242, %p243
      %p245 = pneg %p244
      // Predicated region
      $region37: #{tpu_custom_call.1} parent=5 // pred_check
        _
      $region38: #{tpu_custom_call.1} parent=5 // pred_check_branch
        %247 = sbr.rel (%p244) target = $region40
      $region39: #{tpu_custom_call.1} parent=5 // pred_region
        %s248 = ssub.s32 %s20, 1
        %s249 = sand.u32 %s33, 1
        %s250 = scalar_lea.sflag [#allocation3], %s249
        %s251 = sand.u32 %s33, 1
        %s252 = smul.addr %s251, 64
        %s253 = scalar_lea.vmem [#allocation2], %s252
        // Predicated region
        $region41: #{tpu_custom_call.1} parent=39 // pred_check
          %p254 = pneg %p46
        $region42: #{tpu_custom_call.1} parent=39 // pred_check_branch
          %256 = sbr.rel (%p254) target = $region44
        $region43: #{tpu_custom_call.1} parent=39 // pred_region
          %257 = dma.done %s250, 1024
        $region44: #{tpu_custom_call.1} parent=39 // pred_fallthru
          _
        %s258 = sand.u32 %s25, 1
        %s259 = scalar_lea.sflag [#allocation6], %s258
        %s260 = sand.u32 %s59, 1
        %s261 = smul.addr %s260, 128
        %s262 = scalar_lea.vmem [#allocation5], %s261
        // Predicated region
        $region45: #{tpu_custom_call.1} parent=39 // pred_check
          %p263 = pneg %p72
        $region46: #{tpu_custom_call.1} parent=39 // pred_check_branch
          %265 = sbr.rel (%p263) target = $region48
        $region47: #{tpu_custom_call.1} parent=39 // pred_region
          %266 = dma.done %s259, 2048
        $region48: #{tpu_custom_call.1} parent=39 // pred_fallthru
          _
        // Predicated region
        $region49: #{tpu_custom_call.1} parent=39 // pred_check
          %p267 = pneg %p93
        $region50: #{tpu_custom_call.1} parent=39 // pred_check_branch
          %269 = sbr.rel (%p267) target = $region52
        $region51: #{tpu_custom_call.1} parent=39 // pred_region
          %270 = dma.done [#allocation6], 2048
        $region52: #{tpu_custom_call.1} parent=39 // pred_fallthru
          _
        %s271 = sand.u32 %s33, 1
        %s272 = scalar_lea.sflag [#allocation3], %s271
        %s273 = sand.u32 %s33, 1
        %s274 = smul.addr %s273, 64
        %s275 = scalar_lea.vmem [#allocation2], %s274
        %p276 = pneg %p46
        %p277 = pneg %p43
        %s278 = sand.u32 %s25, 1
        %s279 = scalar_lea.sflag [#allocation6], %s278
        %s280 = sand.u32 %s59, 1
        %s281 = smul.addr %s280, 128
        %s282 = scalar_lea.vmem [#allocation5], %s281
        %p283 = pneg %p72
        %p284 = pneg %p69
        %p285 = pneg %p93
        %p286 = pneg %p90
        %p287 = pneg %p114
        %p288 = pneg %p111
        %p289 = pneg %p135
        %p290 = pneg %p132
        %p291 = pneg %p161
        %p292 = pneg %p158
        %s293 = sand.u32 %s148, 1
        %s294 = scalar_lea.sflag [#allocation4], %s293
        %s295 = sand.u32 %s148, 1
        %s296 = smul.addr %s295, 128
        %s297 = scalar_lea.vmem [#allocation8], %s296
        %s298 = smul.u32 4, %s25
        %s299 = smul.u32 16, %s25
        %s300 = smul.u32 16, %s25
        %v302 = vld [vmem:[%s253] sm:$0xff]
        %v303 = vld [vmem:[%s253 + $0x8] sm:$0xff]
        %v304 = vld [vmem:[%s253 + $0x10] sm:$0xff]
        %v305 = vld [vmem:[%s253 + $0x18] sm:$0xff]
        %v306 = vld [vmem:[%s253 + $0x20] sm:$0xff]
        %v307 = vld [vmem:[%s253 + $0x28] sm:$0xff]
        %v308 = vld [vmem:[%s253 + $0x30] sm:$0xff]
        %v309 = vld [vmem:[%s253 + $0x38] sm:$0xff]
        %v310 = vunpack.c.l.s8.bf16 %v302
        %v311 = vunpack.c.l.s8.bf16 %v303
        %v312 = vunpack.c.h.s8.bf16 %v302
        %v313 = vunpack.c.h.s8.bf16 %v303
        %v314 = vunpack.c.l.s8.bf16 %v304
        %v315 = vunpack.c.l.s8.bf16 %v305
        %v316 = vunpack.c.h.s8.bf16 %v304
        %v317 = vunpack.c.h.s8.bf16 %v305
        %v318 = vunpack.c.l.s8.bf16 %v306
        %v319 = vunpack.c.l.s8.bf16 %v307
        %v320 = vunpack.c.h.s8.bf16 %v306
        %v321 = vunpack.c.h.s8.bf16 %v307
        %v322 = vunpack.c.l.s8.bf16 %v308
        %v323 = vunpack.c.l.s8.bf16 %v309
        %v324 = vunpack.c.h.s8.bf16 %v308
        %v325 = vunpack.c.h.s8.bf16 %v309
        %v326 = vld [vmem:[#allocation7] sm:$0xf]
        %v327 = vld [vmem:[#allocation7 + $0x4] sm:$0xf]
        %v328 = vld [vmem:[#allocation7 + $0x8] sm:$0xf]
        %v329 = vld [vmem:[#allocation7 + $0xc] sm:$0xf]
        %v330 = vld [vmem:[#allocation7 + $0x10] sm:$0xf]
        %v331 = vld [vmem:[#allocation7 + $0x14] sm:$0xf]
        %v332 = vld [vmem:[#allocation7 + $0x18] sm:$0xf]
        %v333 = vld [vmem:[#allocation7 + $0x1c] sm:$0xf]
        %v334 = vld [vmem:[#allocation7 + $0x20] sm:$0xf]
        %v335 = vld [vmem:[#allocation7 + $0x24] sm:$0xf]
        %v336 = vld [vmem:[#allocation7 + $0x28] sm:$0xf]
        %v337 = vld [vmem:[#allocation7 + $0x2c] sm:$0xf]
        %v338 = vld [vmem:[#allocation7 + $0x30] sm:$0xf]
        %v339 = vld [vmem:[#allocation7 + $0x34] sm:$0xf]
        %v340 = vld [vmem:[#allocation7 + $0x38] sm:$0xf]
        %v341 = vld [vmem:[#allocation7 + $0x3c] sm:$0xf]
        %v342 = vld [vmem:[#allocation7 + $0x40] sm:$0xf]
        %v343 = vld [vmem:[#allocation7 + $0x44] sm:$0xf]
        %v344 = vld [vmem:[#allocation7 + $0x48] sm:$0xf]
        %v345 = vld [vmem:[#allocation7 + $0x4c] sm:$0xf]
        %v346 = vld [vmem:[#allocation7 + $0x50] sm:$0xf]
        %v347 = vld [vmem:[#allocation7 + $0x54] sm:$0xf]
        %v348 = vld [vmem:[#allocation7 + $0x58] sm:$0xf]
        %v349 = vld [vmem:[#allocation7 + $0x5c] sm:$0xf]
        %v350 = vld [vmem:[#allocation7 + $0x60] sm:$0xf]
        %v351 = vld [vmem:[#allocation7 + $0x64] sm:$0xf]
        %v352 = vld [vmem:[#allocation7 + $0x68] sm:$0xf]
        %v353 = vld [vmem:[#allocation7 + $0x6c] sm:$0xf]
        %v354 = vld [vmem:[#allocation7 + $0x70] sm:$0xf]
        %v355 = vld [vmem:[#allocation7 + $0x74] sm:$0xf]
        %v356 = vld [vmem:[#allocation7 + $0x78] sm:$0xf]
        %v357 = vld [vmem:[#allocation7 + $0x7c] sm:$0xf]
        %v358 = vld [vmem:[%s3] sm:$0x1]
        %v360 = vlaneseq
        %v361 = vshrl.u32 %v360, 7
        %v362 = vsub.s32 0, %v361
        %v363 = vrot.slane %v358, %v362
        %v397 = vunpack.c.l.b16 %v326
        %v398 = vunpack.c.l.b16 %v327
        %v399 = vunpack.c.l.b16 %v328
        %v400 = vunpack.c.l.b16 %v329
        %v401 = vunpack.c.l.b16 %v330
        %v402 = vunpack.c.l.b16 %v331
        %v403 = vunpack.c.l.b16 %v332
        %v404 = vunpack.c.l.b16 %v333
        %v405 = vunpack.c.l.b16 %v334
        %v406 = vunpack.c.l.b16 %v335
        %v407 = vunpack.c.l.b16 %v336
        %v408 = vunpack.c.l.b16 %v337
        %v409 = vunpack.c.l.b16 %v338
        %v410 = vunpack.c.l.b16 %v339
        %v411 = vunpack.c.l.b16 %v340
        %v412 = vunpack.c.l.b16 %v341
        %v413 = vunpack.c.l.b16 %v342
        %v414 = vunpack.c.l.b16 %v343
        %v415 = vunpack.c.l.b16 %v344
        %v416 = vunpack.c.l.b16 %v345
        %v417 = vunpack.c.l.b16 %v346
        %v418 = vunpack.c.l.b16 %v347
        %v419 = vunpack.c.l.b16 %v348
        %v420 = vunpack.c.l.b16 %v349
        %v421 = vunpack.c.l.b16 %v350
        %v422 = vunpack.c.l.b16 %v351
        %v423 = vunpack.c.l.b16 %v352
        %v424 = vunpack.c.l.b16 %v353
        %v425 = vunpack.c.l.b16 %v354
        %v426 = vunpack.c.l.b16 %v355
        %v427 = vunpack.c.l.b16 %v356
        %v428 = vunpack.c.l.b16 %v357
        %v429 = vpack.c.b16 %v398, %v397
        %v430 = vpack.c.b16 %v400, %v399
        %v431 = vpack.c.b16 %v402, %v401
        %v432 = vpack.c.b16 %v404, %v403
        %v433 = vpack.c.b16 %v406, %v405
        %v434 = vpack.c.b16 %v408, %v407
        %v435 = vpack.c.b16 %v410, %v409
        %v436 = vpack.c.b16 %v412, %v411
        %v437 = vpack.c.b16 %v414, %v413
        %v438 = vpack.c.b16 %v416, %v415
        %v439 = vpack.c.b16 %v418, %v417
        %v440 = vpack.c.b16 %v420, %v419
        %v441 = vpack.c.b16 %v422, %v421
        %v442 = vpack.c.b16 %v424, %v423
        %v443 = vpack.c.b16 %v426, %v425
        %v444 = vpack.c.b16 %v428, %v427
        %461 = vmatprep.subr.bf16.mxu0 0
        %462 = vmatpush1.bf16.msra.mxu0 %v436
        %463 = vmatprep.subr.bf16.mxu0 0
        %464 = vmatpush1.bf16.msra.mxu0 %v435
        %465 = vmatprep.subr.bf16.mxu0 0
        %466 = vmatpush1.bf16.msra.mxu0 %v434
        %467 = vmatprep.subr.bf16.mxu0 0
        %468 = vmatpush1.bf16.msra.mxu0 %v433
        %469 = vmatprep.subr.bf16.mxu0 0
        %470 = vmatpush1.bf16.msra.mxu0 %v432
        %471 = vmatprep.subr.bf16.mxu0 0
        %472 = vmatpush1.bf16.msra.mxu0 %v431
        %473 = vmatprep.subr.bf16.mxu0 0
        %474 = vmatpush1.bf16.msra.mxu0 %v430
        %475 = vmatprep.subr.bf16.mxu0 0
        %476 = vmatpush1.bf16.msra.mxu0 %v429
        %477 = vmatprep.subr.bf16.mxu0 0
        %478 = vmatpush2.bf16.msra.mxu0 %v444
        %479 = vmatprep.subr.bf16.mxu0 0
        %480 = vmatpush2.bf16.msra.mxu0 %v443
        %481 = vmatprep.subr.bf16.mxu0 0
        %482 = vmatpush2.bf16.msra.mxu0 %v442
        %483 = vmatprep.subr.bf16.mxu0 0
        %484 = vmatpush2.bf16.msra.mxu0 %v441
        %485 = vmatprep.subr.bf16.mxu0 0
        %486 = vmatpush2.bf16.msra.mxu0 %v440
        %487 = vmatprep.subr.bf16.mxu0 0
        %488 = vmatpush2.bf16.msra.mxu0 %v439
        %489 = vmatprep.subr.bf16.mxu0 0
        %490 = vmatpush2.bf16.msra.mxu0 %v438
        %491 = vmatprep.subr.bf16.mxu0 0
        %492 = vmatpush2.bf16.msra.mxu0 %v437
        %493 = vmatprep.mubr.bf16.mxu0 %v311
        %494 = vmatmul.mubr.bf16.gmra.mxu0 %v310
        %v495 = vpop.f32.mrf.mxu0
        %v496 = vadd.f32 %v363, %v495
        %v497 = vpop.f32.mrf.mxu0
        %v498 = vpop.f32.mrf.mxu0
        %v499 = vadd.f32 %v363, %v498
        %v500 = vpop.f32.mrf.mxu0
        %501 = vmatprep.mubr.bf16.mxu0 %v313
        %502 = vmatmul.mubr.bf16.gmra.mxu0 %v312
        %v503 = vpop.f32.mrf.mxu0
        %v504 = vadd.f32 %v363, %v503
        %v505 = vpop.f32.mrf.mxu0
        %v506 = vpop.f32.mrf.mxu0
        %v507 = vadd.f32 %v363, %v506
        %v508 = vpop.f32.mrf.mxu0
        %509 = vmatprep.mubr.bf16.mxu0 %v315
        %510 = vmatmul.mubr.bf16.gmra.mxu0 %v314
        %v511 = vpop.f32.mrf.mxu0
        %v512 = vadd.f32 %v363, %v511
        %v513 = vpop.f32.mrf.mxu0
        %v514 = vpop.f32.mrf.mxu0
        %v515 = vadd.f32 %v363, %v514
        %v516 = vpop.f32.mrf.mxu0
        %517 = vmatprep.mubr.bf16.mxu0 %v317
        %518 = vmatmul.mubr.bf16.gmra.mxu0 %v316
        %v519 = vpop.f32.mrf.mxu0
        %v520 = vadd.f32 %v363, %v519
        %v521 = vpop.f32.mrf.mxu0
        %v522 = vpop.f32.mrf.mxu0
        %v523 = vadd.f32 %v363, %v522
        %v524 = vpop.f32.mrf.mxu0
        %525 = vmatprep.mubr.bf16.mxu0 %v319
        %526 = vmatmul.mubr.bf16.gmra.mxu0 %v318
        %v527 = vpop.f32.mrf.mxu0
        %v528 = vadd.f32 %v363, %v527
        %v529 = vpop.f32.mrf.mxu0
        %v530 = vpop.f32.mrf.mxu0
        %v531 = vadd.f32 %v363, %v530
        %v532 = vpop.f32.mrf.mxu0
        %533 = vmatprep.mubr.bf16.mxu0 %v321
        %534 = vmatmul.mubr.bf16.gmra.mxu0 %v320
        %v535 = vpop.f32.mrf.mxu0
        %v536 = vadd.f32 %v363, %v535
        %v537 = vpop.f32.mrf.mxu0
        %v538 = vpop.f32.mrf.mxu0
        %v539 = vadd.f32 %v363, %v538
        %v540 = vpop.f32.mrf.mxu0
        %541 = vmatprep.mubr.bf16.mxu0 %v323
        %542 = vmatmul.mubr.bf16.gmra.mxu0 %v322
        %v543 = vpop.f32.mrf.mxu0
        %v544 = vadd.f32 %v363, %v543
        %v545 = vpop.f32.mrf.mxu0
        %v546 = vpop.f32.mrf.mxu0
        %v547 = vadd.f32 %v363, %v546
        %v548 = vpop.f32.mrf.mxu0
        %549 = vmatprep.mubr.bf16.mxu0 %v325
        %550 = vmatmul.mubr.bf16.gmra.mxu0 %v324
        %v551 = vpop.f32.mrf.mxu0
        %v552 = vadd.f32 %v363, %v551
        %v553 = vpop.f32.mrf.mxu0
        %v554 = vpop.f32.mrf.mxu0
        %v555 = vadd.f32 %v363, %v554
        %v556 = vpop.f32.mrf.mxu0
        %557 = vdwg.mxu0
        %v558 = vld [vmem:[%s4] sm:$0x1]
        %v560 = vlaneseq
        %v561 = vshrl.u32 %v560, 7
        %v562 = vsub.s32 0, %v561
        %v563 = vrot.slane %v558, %v562
        %v565 = vmul.f32 %v496, %v563
        %v566 = vmul.f32 %v499, %v563
        %v567 = vmul.f32 %v504, %v563
        %v568 = vmul.f32 %v507, %v563
        %v569 = vmul.f32 %v512, %v563
        %v570 = vmul.f32 %v515, %v563
        %v571 = vmul.f32 %v520, %v563
        %v572 = vmul.f32 %v523, %v563
        %v573 = vmul.f32 %v528, %v563
        %v574 = vmul.f32 %v531, %v563
        %v575 = vmul.f32 %v536, %v563
        %v576 = vmul.f32 %v539, %v563
        %v577 = vmul.f32 %v544, %v563
        %v578 = vmul.f32 %v547, %v563
        %v579 = vmul.f32 %v552, %v563
        %v580 = vmul.f32 %v555, %v563
        %v581 = vld [vmem:[%s262] sm:$0xff]
        %v582 = vld [vmem:[%s262 + $0x8] sm:$0xff]
        %v583 = vld [vmem:[%s262 + $0x10] sm:$0xff]
        %v584 = vld [vmem:[%s262 + $0x18] sm:$0xff]
        %v585 = vld [vmem:[%s262 + $0x20] sm:$0xff]
        %v586 = vld [vmem:[%s262 + $0x28] sm:$0xff]
        %v587 = vld [vmem:[%s262 + $0x30] sm:$0xff]
        %v588 = vld [vmem:[%s262 + $0x38] sm:$0xff]
        %v589 = vld [vmem:[%s262 + $0x40] sm:$0xff]
        %v590 = vld [vmem:[%s262 + $0x48] sm:$0xff]
        %v591 = vld [vmem:[%s262 + $0x50] sm:$0xff]
        %v592 = vld [vmem:[%s262 + $0x58] sm:$0xff]
        %v593 = vld [vmem:[%s262 + $0x60] sm:$0xff]
        %v594 = vld [vmem:[%s262 + $0x68] sm:$0xff]
        %v595 = vld [vmem:[%s262 + $0x70] sm:$0xff]
        %v596 = vld [vmem:[%s262 + $0x78] sm:$0xff]
        %v597 = vadd.f32 %v565, %v581
        %v598 = vadd.f32 %v566, %v582
        %v599 = vadd.f32 %v567, %v583
        %v600 = vadd.f32 %v568, %v584
        %v601 = vadd.f32 %v569, %v585
        %v602 = vadd.f32 %v570, %v586
        %v603 = vadd.f32 %v571, %v587
        %v604 = vadd.f32 %v572, %v588
        %v605 = vadd.f32 %v573, %v589
        %v606 = vadd.f32 %v574, %v590
        %v607 = vadd.f32 %v575, %v591
        %v608 = vadd.f32 %v576, %v592
        %v609 = vadd.f32 %v577, %v593
        %v610 = vadd.f32 %v578, %v594
        %v611 = vadd.f32 %v579, %v595
        %v612 = vadd.f32 %v580, %v596
        %613 = vst [vmem:[%s297] sm:$0xff] %v597
        %614 = vst [vmem:[%s297 + $0x8] sm:$0xff] %v598
        %615 = vst [vmem:[%s297 + $0x10] sm:$0xff] %v599
        %616 = vst [vmem:[%s297 + $0x18] sm:$0xff] %v600
        %617 = vst [vmem:[%s297 + $0x20] sm:$0xff] %v601
        %618 = vst [vmem:[%s297 + $0x28] sm:$0xff] %v602
        %619 = vst [vmem:[%s297 + $0x30] sm:$0xff] %v603
        %620 = vst [vmem:[%s297 + $0x38] sm:$0xff] %v604
        %621 = vst [vmem:[%s297 + $0x40] sm:$0xff] %v605
        %622 = vst [vmem:[%s297 + $0x48] sm:$0xff] %v606
        %623 = vst [vmem:[%s297 + $0x50] sm:$0xff] %v607
        %624 = vst [vmem:[%s297 + $0x58] sm:$0xff] %v608
        %625 = vst [vmem:[%s297 + $0x60] sm:$0xff] %v609
        %626 = vst [vmem:[%s297 + $0x68] sm:$0xff] %v610
        %627 = vst [vmem:[%s297 + $0x70] sm:$0xff] %v611
        %628 = vst [vmem:[%s297 + $0x78] sm:$0xff] %v612
        %s629 = sand.u32 %s148, 1
        %s630 = scalar_lea.sflag [#allocation4], %s629
        %s631 = sand.u32 %s148, 1
        %s632 = smul.addr %s631, 128
        %s633 = scalar_lea.vmem [#allocation8], %s632
        // Predicated region
        $region53: #{tpu_custom_call.1} parent=39 // pred_check
          %p634 = pneg %p158
        $region54: #{tpu_custom_call.1} parent=39 // pred_check_branch
          %636 = sbr.rel (%p634) target = $region56
        $region55: #{tpu_custom_call.1} parent=39 // pred_region
          %s637 = smul.u32 16, %s25
          %s639 = ssub.s32 2048, 2048
          %640 = vsyncadd %s630, %s639
          %s641 = smul.addr %s637, 128
          %s642 = scalar_lea.hbm %s5, %s641
          %s643 = sshll.u32 %s633, 4
          %s644 = int_to_ptr.vmem [resolvable:$true] %s643
          %649 = dma.vmem_to_hbm [thread:$0]  %s644, 2048, %s642, %s630, 128, 128, 8
        $region56: #{tpu_custom_call.1} parent=39 // pred_fallthru
          _
      $region40: #{tpu_custom_call.1} parent=5 // pred_fallthru
        _
      %p650 = scmp.le.s32.totalorder 2, %s20
      // Predicated region
      $region57: #{tpu_custom_call.1} parent=5 // pred_check
        %p651 = pneg %p650
      $region58: #{tpu_custom_call.1} parent=5 // pred_check_branch
        %653 = sbr.rel (%p651) target = $region60
      $region59: #{tpu_custom_call.1} parent=5 // pred_region
        %s654 = ssub.s32 %s20, 2
        // Predicated region
        $region61: #{tpu_custom_call.1} parent=59 // pred_check
          %p655 = pneg %p164
        $region62: #{tpu_custom_call.1} parent=59 // pred_check_branch
          %657 = sbr.rel (%p655) target = $region64
        $region63: #{tpu_custom_call.1} parent=59 // pred_region
          %s658 = sand.u32 %s149, 1
          %s659 = scalar_lea.sflag [#allocation4], %s658
          %s660 = sand.u32 %s149, 1
          %s661 = smul.addr %s660, 128
          %s662 = scalar_lea.vmem [#allocation8], %s661
          %663 = dma.done %s659, 2048
        $region64: #{tpu_custom_call.1} parent=59 // pred_fallthru
          _
      $region60: #{tpu_custom_call.1} parent=5 // pred_fallthru
        _
    $region6: #{tpu_custom_call.1} parent=1 // loop_footer
      %s24 = sadd.s32 1, %s20
    $region7: #{tpu_custom_call.1} parent=1 // loop_footer_branch
      %19 = sbr.rel target = $region3
    $region8: #{tpu_custom_call.1} parent=1 // loop_exit
      _
    %664 = vsyncpa [#allocation3], 1
    %s665 = scalar_lea.sflag [#allocation3], 1
    %666 = vsyncpa %s665, 1
    %667 = vsyncpa [#allocation6], 1
    %s668 = scalar_lea.sflag [#allocation6], 1
    %669 = vsyncpa %s668, 1
    %670 = vsyncpa [#allocation4], 1
    %s671 = scalar_lea.sflag [#allocation4], 1
    %672 = vsyncpa %s671, 1

// kernel: tpu_custom_call.1
$region0: #{tpu_custom_call.1}
  #allocation0 [shape = 'u32[]', space=smem, size = 0x4, offset = 0x4, fixed_abs, tag = 'smem constant byte address 0x4 - core index']
  #allocation1 [shape = 'u32[144,128]{1,0:T(1,128)}', space=vmem, size = 0x12000, scoped, tag = 'internal scratch']
  %s0 = inlined_call_operand.hbm [shape: s8[256,256], index: 0, kind: input, shape index: {}]
  %s1 = inlined_call_operand.hbm [shape: f32[256,128], index: 1, kind: input, shape index: {}]
  %s2 = inlined_call_operand.hbm [shape: bf16[256,128], index: 2, kind: input, shape index: {}]
  %s3 = inlined_call_operand.vmem [shape: f32[1,128], index: 3, kind: input, shape index: {}]
  %s4 = inlined_call_operand.vmem [shape: f32[1,128], index: 4, kind: input, shape index: {}]
  %s5 = inlined_call_operand.hbm [shape: f32[256,128], index: 5, kind: output, shape index: {}]
  %s6 = sld [smem:[#allocation0]]
  $region65: #{tpu_custom_call.1} parent=0
    _
  %s8 = ssub.s32 1, %s6
  %s9 = scalar_select 0, %s8, %s6
  $region1: #{tpu_custom_call.1} parent=0
    #allocation2 [shape = 'u8[65536]{0}', space=vmem, size = 0x10000, scoped, tag = 'input window, operand 0']
    #allocation3 [shape = 's32[2]{0}', space=sflag, size = 0x8, scoped, tag = 'scoped memory for tpu_custom_call.1']
    #allocation4 [shape = 's32[2]{0}', space=sflag, size = 0x8, scoped, tag = 'scoped memory for tpu_custom_call.1']
    #allocation5 [shape = 'u8[131072]{0}', space=vmem, size = 0x20000, scoped, tag = 'input window, operand 1']
    #allocation6 [shape = 's32[2]{0}', space=sflag, size = 0x8, scoped, tag = 'scoped memory for tpu_custom_call.1']
    #allocation7 [shape = 'u8[65536]{0}', space=vmem, size = 0x10000, scoped, tag = 'input window, operand 2, single buffered']
    #allocation8 [shape = 'u8[131072]{0}', space=vmem, size = 0x20000, scoped, tag = 'output window, operand 0']
    %10 = vsyncpa [#allocation3], 0
    %s11 = scalar_lea.sflag [#allocation3], 1
    %12 = vsyncpa %s11, 0
    %13 = vsyncpa [#allocation6], 0
    %s14 = scalar_lea.sflag [#allocation6], 1
    %15 = vsyncpa %s14, 0
    %16 = vsyncpa [#allocation4], 0
    %s17 = scalar_lea.sflag [#allocation4], 1
    %18 = vsyncpa %s17, 0
    loop: start=0, step=1, limit=4
    $region2: #{tpu_custom_call.1} parent=1 // loop_pre_header
      _
    $region3: #{tpu_custom_call.1} parent=1 // loop_header
      %s20 = sphi 0, %s24
      %p21 = scmp.ge.s32.totalorder %s20, 4
      %s30 = sphi 0, %s32
      %s33 = sphi 0, %s30
      %s34 = sphi 0, %s33
      %s50 = sphi 0, %s34
      %s56 = sphi 0, %s58
      %s59 = sphi 0, %s56
      %s60 = sphi 0, %s59
      %s76 = sphi 0, %s60
      %s80 = sphi 0, %s80
      %s82 = sphi 0, %s80
      %s83 = sphi 0, %s82
      %s97 = sphi 0, %s83
      %s101 = sphi 0, %s101
      %s103 = sphi 0, %s101
      %s104 = sphi 0, %s103
      %s118 = sphi 0, %s104
      %s122 = sphi 0, %s122
      %s124 = sphi 0, %s122
      %s125 = sphi 0, %s124
      %s139 = sphi 0, %s125
      %s145 = sphi 0, %s147
      %s148 = sphi 0, %s145
      %s149 = sphi 0, %s148
      %s165 = sphi 0, %s149
    $region4: #{tpu_custom_call.1} parent=1 // loop_header_branch
      %23 = sbr.rel (%p21) target = $region8
    $region5: #{tpu_custom_call.1} parent=1 // loop_body
      %s25 = ssub.s32 %s20, 1
      %s26 = ssub.s32 %s20, 2
      %s27 = sadd.s32 %s20, 1
      %s28 = ssub.s32 %s20, %s27
      %p29 = scmp.eq.s32.totalorder %s28, 0
      %s31 = sadd.s32 %s30, 1
      %s32 = scalar_select %p29, %s30, %s31
      %p35 = pneg %p29
      %p36 = scmp.eq.s32.totalorder %s20, 1
      %p37 = por %p35, %p36
      %p38 = scmp.ne.s32.totalorder %s30, %s33
      %p39 = scmp.eq.s32.totalorder %s20, 0
      %p40 = por %p38, %p39
      %p41 = scmp.ne.s32.totalorder %s30, %s33
      %p42 = scmp.eq.s32.totalorder %s25, 1
      %p43 = por %p41, %p42
      %p44 = scmp.ne.s32.totalorder %s33, %s34
      %p45 = scmp.eq.s32.totalorder %s25, 0
      %p46 = por %p44, %p45
      %p47 = scmp.ne.s32.totalorder %s33, %s34
      %p48 = scmp.eq.s32.totalorder %s26, 1
      %p49 = por %p47, %p48
      %p51 = scmp.ne.s32.totalorder %s34, %s50
      %p52 = scmp.eq.s32.totalorder %s26, 0
      %p53 = por %p51, %p52
      %s54 = ssub.s32 %s20, %s27
      %p55 = scmp.eq.s32.totalorder %s54, 0
      %s57 = sadd.s32 %s56, 1
      %s58 = scalar_select %p55, %s56, %s57
      %p61 = pneg %p55
      %p62 = scmp.eq.s32.totalorder %s20, 1
      %p63 = por %p61, %p62
      %p64 = scmp.ne.s32.totalorder %s56, %s59
      %p65 = scmp.eq.s32.totalorder %s20, 0
      %p66 = por %p64, %p65
      %p67 = scmp.ne.s32.totalorder %s56, %s59
      %p68 = scmp.eq.s32.totalorder %s25, 1
      %p69 = por %p67, %p68
      %p70 = scmp.ne.s32.totalorder %s59, %s60
      %p71 = scmp.eq.s32.totalorder %s25, 0
      %p72 = por %p70, %p71
      %p73 = scmp.ne.s32.totalorder %s59, %s60
      %p74 = scmp.eq.s32.totalorder %s26, 1
      %p75 = por %p73, %p74
      %p77 = scmp.ne.s32.totalorder %s60, %s76
      %p78 = scmp.eq.s32.totalorder %s26, 0
      %p79 = por %p77, %p78
      %s81 = sadd.s32 %s80, 1
      %p84 = scmp.eq.s32.totalorder %s20, 1
      %p85 = scmp.ne.s32.totalorder %s80, %s82
      %p86 = scmp.eq.s32.totalorder %s20, 0
      %p87 = por %p85, %p86
      %p88 = scmp.ne.s32.totalorder %s80, %s82
      %p89 = scmp.eq.s32.totalorder %s25, 1
      %p90 = por %p88, %p89
      %p91 = scmp.ne.s32.totalorder %s82, %s83
      %p92 = scmp.eq.s32.totalorder %s25, 0
      %p93 = por %p91, %p92
      %p94 = scmp.ne.s32.totalorder %s82, %s83
      %p95 = scmp.eq.s32.totalorder %s26, 1
      %p96 = por %p94, %p95
      %p98 = scmp.ne.s32.totalorder %s83, %s97
      %p99 = scmp.eq.s32.totalorder %s26, 0
      %p100 = por %p98, %p99
      %s102 = sadd.s32 %s101, 1
      %p105 = scmp.eq.s32.totalorder %s20, 1
      %p106 = scmp.ne.s32.totalorder %s101, %s103
      %p107 = scmp.eq.s32.totalorder %s20, 0
      %p108 = por %p106, %p107
      %p109 = scmp.ne.s32.totalorder %s101, %s103
      %p110 = scmp.eq.s32.totalorder %s25, 1
      %p111 = por %p109, %p110
      %p112 = scmp.ne.s32.totalorder %s103, %s104
      %p113 = scmp.eq.s32.totalorder %s25, 0
      %p114 = por %p112, %p113
      %p115 = scmp.ne.s32.totalorder %s103, %s104
      %p116 = scmp.eq.s32.totalorder %s26, 1
      %p117 = por %p115, %p116
      %p119 = scmp.ne.s32.totalorder %s104, %s118
      %p120 = scmp.eq.s32.totalorder %s26, 0
      %p121 = por %p119, %p120
      %s123 = sadd.s32 %s122, 1
      %p126 = scmp.eq.s32.totalorder %s20, 1
      %p127 = scmp.ne.s32.totalorder %s122, %s124
      %p128 = scmp.eq.s32.totalorder %s20, 0
      %p129 = por %p127, %p128
      %p130 = scmp.ne.s32.totalorder %s122, %s124
      %p131 = scmp.eq.s32.totalorder %s25, 1
      %p132 = por %p130, %p131
      %p133 = scmp.ne.s32.totalorder %s124, %s125
      %p134 = scmp.eq.s32.totalorder %s25, 0
      %p135 = por %p133, %p134
      %p136 = scmp.ne.s32.totalorder %s124, %s125
      %p137 = scmp.eq.s32.totalorder %s26, 1
      %p138 = por %p136, %p137
      %p140 = scmp.ne.s32.totalorder %s125, %s139
      %p141 = scmp.eq.s32.totalorder %s26, 0
      %p142 = por %p140, %p141
      %s143 = ssub.s32 %s20, %s27
      %p144 = scmp.eq.s32.totalorder %s143, 0
      %s146 = sadd.s32 %s145, 1
      %s147 = scalar_select %p144, %s145, %s146
      %p150 = pneg %p144
      %p151 = scmp.eq.s32.totalorder %s20, 1
      %p152 = por %p150, %p151
      %p153 = scmp.ne.s32.totalorder %s145, %s148
      %p154 = scmp.eq.s32.totalorder %s20, 0
      %p155 = por %p153, %p154
      %p156 = scmp.ne.s32.totalorder %s145, %s148
      %p157 = scmp.eq.s32.totalorder %s25, 1
      %p158 = por %p156, %p157
      %p159 = scmp.ne.s32.totalorder %s148, %s149
      %p160 = scmp.eq.s32.totalorder %s25, 0
      %p161 = por %p159, %p160
      %p162 = scmp.ne.s32.totalorder %s148, %s149
      %p163 = scmp.eq.s32.totalorder %s26, 1
      %p164 = por %p162, %p163
      %p166 = scmp.ne.s32.totalorder %s149, %s165
      %p167 = scmp.eq.s32.totalorder %s26, 0
      %p168 = por %p166, %p167
      %p169 = scmp.le.s32.totalorder 1, %s20
      %p170 = scmp.lt.s32.totalorder %s20, 3
      %p171 = pnand %p169, %p170
      %p172 = pneg %p171
      // Predicated region
      $region9: #{tpu_custom_call.1} parent=5 // pred_check
        _
      $region10: #{tpu_custom_call.1} parent=5 // pred_check_branch
        %174 = sbr.rel (%p171) target = $region12
      $region11: #{tpu_custom_call.1} parent=5 // pred_region
        %s175 = ssub.s32 %s20, 1
        // Predicated region
        $region13: #{tpu_custom_call.1} parent=11 // pred_check
          %p176 = pneg %p93
        $region14: #{tpu_custom_call.1} parent=11 // pred_check_branch
          %178 = sbr.rel (%p176) target = $region16
        $region15: #{tpu_custom_call.1} parent=11 // pred_region
          %s180 = ssub.s32 2048, 2048
          %181 = vsyncadd [#allocation6], %s180
          %s182 = sshll.u32 [#allocation7], 4
          %s183 = int_to_ptr.vmem [resolvable:$true] %s182
          %188 = dma.hbm_to_vmem [thread:$0]  %s2, 2048, %s183, [#allocation6], 64, 64, 4
        $region16: #{tpu_custom_call.1} parent=11 // pred_fallthru
          _
        // Predicated region
        $region17: #{tpu_custom_call.1} parent=11 // pred_check
          %p189 = pneg %p114
        $region18: #{tpu_custom_call.1} parent=11 // pred_check_branch
          %191 = sbr.rel (%p189) target = $region20
        $region19: #{tpu_custom_call.1} parent=11 // pred_region
          _
        $region20: #{tpu_custom_call.1} parent=11 // pred_fallthru
          _
        // Predicated region
        $region21: #{tpu_custom_call.1} parent=11 // pred_check
          %p192 = pneg %p135
        $region22: #{tpu_custom_call.1} parent=11 // pred_check_branch
          %194 = sbr.rel (%p192) target = $region24
        $region23: #{tpu_custom_call.1} parent=11 // pred_region
          _
        $region24: #{tpu_custom_call.1} parent=11 // pred_fallthru
          _
      $region12: #{tpu_custom_call.1} parent=5 // pred_fallthru
        _
      %p195 = scmp.lt.s32.totalorder %s20, 2
      // Predicated region
      $region25: #{tpu_custom_call.1} parent=5 // pred_check
        %p196 = pneg %p195
      $region26: #{tpu_custom_call.1} parent=5 // pred_check_branch
        %198 = sbr.rel (%p196) target = $region28
      $region27: #{tpu_custom_call.1} parent=5 // pred_region
        // Predicated region
        $region29: #{tpu_custom_call.1} parent=27 // pred_check
          %p199 = pneg %p40
        $region30: #{tpu_custom_call.1} parent=27 // pred_check_branch
          %201 = sbr.rel (%p199) target = $region32
        $region31: #{tpu_custom_call.1} parent=27 // pred_region
          %s202 = sand.u32 %s30, 1
          %s203 = scalar_lea.sflag [#allocation3], %s202
          %s204 = sand.u32 %s30, 1
          %s205 = smul.addr %s204, 64
          %s206 = scalar_lea.vmem [#allocation2], %s205
          %s207 = smul.u32 4, %s20
          %s209 = ssub.s32 1024, 1024
          %210 = vsyncadd %s203, %s209
          %s211 = smul.addr %s207, 2
          %s212 = smul.addr %s211, 128
          %s213 = scalar_lea.hbm %s0, %s212
          %s214 = sshll.u32 %s206, 4
          %s215 = int_to_ptr.vmem [resolvable:$true] %s214
          %220 = dma.hbm_to_vmem [thread:$0]  %s213, 1024, %s215, %s203, 256, 256, 16
        $region32: #{tpu_custom_call.1} parent=27 // pred_fallthru
          _
        // Predicated region
        $region33: #{tpu_custom_call.1} parent=27 // pred_check
          %p221 = pneg %p66
        $region34: #{tpu_custom_call.1} parent=27 // pred_check_branch
          %223 = sbr.rel (%p221) target = $region36
        $region35: #{tpu_custom_call.1} parent=27 // pred_region
          %s224 = sand.u32 %s20, 1
          %s225 = scalar_lea.sflag [#allocation6], %s224
          %s226 = sand.u32 %s56, 1
          %s227 = smul.addr %s226, 128
          %s228 = scalar_lea.vmem [#allocation5], %s227
          %s229 = smul.u32 16, %s20
          %s231 = ssub.s32 2048, 2048
          %232 = vsyncadd %s225, %s231
          %s233 = smul.addr %s229, 128
          %s234 = scalar_lea.hbm %s1, %s233
          %s235 = sshll.u32 %s228, 4
          %s236 = int_to_ptr.vmem [resolvable:$true] %s235
          %241 = dma.hbm_to_vmem [thread:$0]  %s234, 2048, %s236, %s225, 128, 128, 8
        $region36: #{tpu_custom_call.1} parent=27 // pred_fallthru
          _
      $region28: #{tpu_custom_call.1} parent=5 // pred_fallthru
        _
      %p242 = scmp.le.s32.totalorder 1, %s20
      %p243 = scmp.lt.s32.totalorder %s20, 3
      %p244 = pnand %p242, %p243
      %p245 = pneg %p244
      // Predicated region
      $region37: #{tpu_custom_call.1} parent=5 // pred_check
        _
      $region38: #{tpu_custom_call.1} parent=5 // pred_check_branch
        %247 = sbr.rel (%p244) target = $region40
      $region39: #{tpu_custom_call.1} parent=5 // pred_region
        %s248 = ssub.s32 %s20, 1
        %s249 = sand.u32 %s33, 1
        %s250 = scalar_lea.sflag [#allocation3], %s249
        %s251 = sand.u32 %s33, 1
        %s252 = smul.addr %s251, 64
        %s253 = scalar_lea.vmem [#allocation2], %s252
        // Predicated region
        $region41: #{tpu_custom_call.1} parent=39 // pred_check
          %p254 = pneg %p46
        $region42: #{tpu_custom_call.1} parent=39 // pred_check_branch
          %256 = sbr.rel (%p254) target = $region44
        $region43: #{tpu_custom_call.1} parent=39 // pred_region
          %257 = dma.done %s250, 1024
        $region44: #{tpu_custom_call.1} parent=39 // pred_fallthru
          _
        %s258 = sand.u32 %s25, 1
        %s259 = scalar_lea.sflag [#allocation6], %s258
        %s260 = sand.u32 %s59, 1
        %s261 = smul.addr %s260, 128
        %s262 = scalar_lea.vmem [#allocation5], %s261
        // Predicated region
        $region45: #{tpu_custom_call.1} parent=39 // pred_check
          %p263 = pneg %p72
        $region46: #{tpu_custom_call.1} parent=39 // pred_check_branch
          %265 = sbr.rel (%p263) target = $region48
        $region47: #{tpu_custom_call.1} parent=39 // pred_region
          %266 = dma.done %s259, 2048
        $region48: #{tpu_custom_call.1} parent=39 // pred_fallthru
          _
        // Predicated region
        $region49: #{tpu_custom_call.1} parent=39 // pred_check
          %p267 = pneg %p93
        $region50: #{tpu_custom_call.1} parent=39 // pred_check_branch
          %269 = sbr.rel (%p267) target = $region52
        $region51: #{tpu_custom_call.1} parent=39 // pred_region
          %270 = dma.done [#allocation6], 2048
        $region52: #{tpu_custom_call.1} parent=39 // pred_fallthru
          _
        %s271 = sand.u32 %s33, 1
        %s272 = scalar_lea.sflag [#allocation3], %s271
        %s273 = sand.u32 %s33, 1
        %s274 = smul.addr %s273, 64
        %s275 = scalar_lea.vmem [#allocation2], %s274
        %p276 = pneg %p46
        %p277 = pneg %p43
        %s278 = sand.u32 %s25, 1
        %s279 = scalar_lea.sflag [#allocation6], %s278
        %s280 = sand.u32 %s59, 1
        %s281 = smul.addr %s280, 128
        %s282 = scalar_lea.vmem [#allocation5], %s281
        %p283 = pneg %p72
        %p284 = pneg %p69
        %p285 = pneg %p93
        %p286 = pneg %p90
        %p287 = pneg %p114
        %p288 = pneg %p111
        %p289 = pneg %p135
        %p290 = pneg %p132
        %p291 = pneg %p161
        %p292 = pneg %p158
        %s293 = sand.u32 %s148, 1
        %s294 = scalar_lea.sflag [#allocation4], %s293
        %s295 = sand.u32 %s148, 1
        %s296 = smul.addr %s295, 128
        %s297 = scalar_lea.vmem [#allocation8], %s296
        %s298 = smul.u32 4, %s25
        %s299 = smul.u32 16, %s25
        %s300 = smul.u32 16, %s25
        %v302 = vld [vmem:[%s253] sm:$0xff]
        %v303 = vld [vmem:[%s253 + $0x8] sm:$0xff]
        %v304 = vld [vmem:[%s253 + $0x10] sm:$0xff]
        %v305 = vld [vmem:[%s253 + $0x18] sm:$0xff]
        %v306 = vld [vmem:[%s253 + $0x20] sm:$0xff]
        %v307 = vld [vmem:[%s253 + $0x28] sm:$0xff]
        %v308 = vld [vmem:[%s253 + $0x30] sm:$0xff]
        %v309 = vld [vmem:[%s253 + $0x38] sm:$0xff]
        %v310 = vunpack.c.l.s8.bf16 %v302
        %v311 = vunpack.c.l.s8.bf16 %v303
        %v312 = vunpack.c.h.s8.bf16 %v302
        %v313 = vunpack.c.h.s8.bf16 %v303
        %v314 = vunpack.c.l.s8.bf16 %v304
        %v315 = vunpack.c.l.s8.bf16 %v305
        %v316 = vunpack.c.h.s8.bf16 %v304
        %v317 = vunpack.c.h.s8.bf16 %v305
        %v318 = vunpack.c.l.s8.bf16 %v306
        %v319 = vunpack.c.l.s8.bf16 %v307
        %v320 = vunpack.c.h.s8.bf16 %v306
        %v321 = vunpack.c.h.s8.bf16 %v307
        %v322 = vunpack.c.l.s8.bf16 %v308
        %v323 = vunpack.c.l.s8.bf16 %v309
        %v324 = vunpack.c.h.s8.bf16 %v308
        %v325 = vunpack.c.h.s8.bf16 %v309
        %v326 = vld [vmem:[#allocation7] sm:$0xf]
        %v327 = vld [vmem:[#allocation7 + $0x4] sm:$0xf]
        %v328 = vld [vmem:[#allocation7 + $0x8] sm:$0xf]
        %v329 = vld [vmem:[#allocation7 + $0xc] sm:$0xf]
        %v330 = vld [vmem:[#allocation7 + $0x10] sm:$0xf]
        %v331 = vld [vmem:[#allocation7 + $0x14] sm:$0xf]
        %v332 = vld [vmem:[#allocation7 + $0x18] sm:$0xf]
        %v333 = vld [vmem:[#allocation7 + $0x1c] sm:$0xf]
        %v334 = vld [vmem:[#allocation7 + $0x20] sm:$0xf]
        %v335 = vld [vmem:[#allocation7 + $0x24] sm:$0xf]
        %v336 = vld [vmem:[#allocation7 + $0x28] sm:$0xf]
        %v337 = vld [vmem:[#allocation7 + $0x2c] sm:$0xf]
        %v338 = vld [vmem:[#allocation7 + $0x30] sm:$0xf]
        %v339 = vld [vmem:[#allocation7 + $0x34] sm:$0xf]
        %v340 = vld [vmem:[#allocation7 + $0x38] sm:$0xf]
        %v341 = vld [vmem:[#allocation7 + $0x3c] sm:$0xf]
        %v342 = vld [vmem:[#allocation7 + $0x40] sm:$0xf]
        %v343 = vld [vmem:[#allocation7 + $0x44] sm:$0xf]
        %v344 = vld [vmem:[#allocation7 + $0x48] sm:$0xf]
        %v345 = vld [vmem:[#allocation7 + $0x4c] sm:$0xf]
        %v346 = vld [vmem:[#allocation7 + $0x50] sm:$0xf]
        %v347 = vld [vmem:[#allocation7 + $0x54] sm:$0xf]
        %v348 = vld [vmem:[#allocation7 + $0x58] sm:$0xf]
        %v349 = vld [vmem:[#allocation7 + $0x5c] sm:$0xf]
        %v350 = vld [vmem:[#allocation7 + $0x60] sm:$0xf]
        %v351 = vld [vmem:[#allocation7 + $0x64] sm:$0xf]
        %v352 = vld [vmem:[#allocation7 + $0x68] sm:$0xf]
        %v353 = vld [vmem:[#allocation7 + $0x6c] sm:$0xf]
        %v354 = vld [vmem:[#allocation7 + $0x70] sm:$0xf]
        %v355 = vld [vmem:[#allocation7 + $0x74] sm:$0xf]
        %v356 = vld [vmem:[#allocation7 + $0x78] sm:$0xf]
        %v357 = vld [vmem:[#allocation7 + $0x7c] sm:$0xf]
        %v358 = vld [vmem:[%s3] sm:$0x1]
        %v360 = vlaneseq
        %v361 = vshrl.u32 %v360, 7
        %v362 = vsub.s32 0, %v361
        %v363 = vrot.slane %v358, %v362
        %v397 = vunpack.c.l.b16 %v326
        %v398 = vunpack.c.l.b16 %v327
        %v399 = vunpack.c.l.b16 %v328
        %v400 = vunpack.c.l.b16 %v329
        %v401 = vunpack.c.l.b16 %v330
        %v402 = vunpack.c.l.b16 %v331
        %v403 = vunpack.c.l.b16 %v332
        %v404 = vunpack.c.l.b16 %v333
        %v405 = vunpack.c.l.b16 %v334
        %v406 = vunpack.c.l.b16 %v335
        %v407 = vunpack.c.l.b16 %v336
        %v408 = vunpack.c.l.b16 %v337
        %v409 = vunpack.c.l.b16 %v338
        %v410 = vunpack.c.l.b16 %v339
        %v411 = vunpack.c.l.b16 %v340
        %v412 = vunpack.c.l.b16 %v341
        %v413 = vunpack.c.l.b16 %v342
        %v414 = vunpack.c.l.b16 %v343
        %v415 = vunpack.c.l.b16 %v344
        %v416 = vunpack.c.l.b16 %v345
        %v417 = vunpack.c.l.b16 %v346
        %v418 = vunpack.c.l.b16 %v347
        %v419 = vunpack.c.l.b16 %v348
        %v420 = vunpack.c.l.b16 %v349
        %v421 = vunpack.c.l.b16 %v350
        %v422 = vunpack.c.l.b16 %v351
        %v423 = vunpack.c.l.b16 %v352
        %v424 = vunpack.c.l.b16 %v353
        %v425 = vunpack.c.l.b16 %v354
        %v426 = vunpack.c.l.b16 %v355
        %v427 = vunpack.c.l.b16 %v356
        %v428 = vunpack.c.l.b16 %v357
        %v429 = vpack.c.b16 %v398, %v397
        %v430 = vpack.c.b16 %v400, %v399
        %v431 = vpack.c.b16 %v402, %v401
        %v432 = vpack.c.b16 %v404, %v403
        %v433 = vpack.c.b16 %v406, %v405
        %v434 = vpack.c.b16 %v408, %v407
        %v435 = vpack.c.b16 %v410, %v409
        %v436 = vpack.c.b16 %v412, %v411
        %v437 = vpack.c.b16 %v414, %v413
        %v438 = vpack.c.b16 %v416, %v415
        %v439 = vpack.c.b16 %v418, %v417
        %v440 = vpack.c.b16 %v420, %v419
        %v441 = vpack.c.b16 %v422, %v421
        %v442 = vpack.c.b16 %v424, %v423
        %v443 = vpack.c.b16 %v426, %v425
        %v444 = vpack.c.b16 %v428, %v427
        %461 = vmatprep.subr.bf16.mxu0 0
        %462 = vmatpush1.bf16.msra.mxu0 %v436
        %463 = vmatprep.subr.bf16.mxu0 0
        %464 = vmatpush1.bf16.msra.mxu0 %v435
        %465 = vmatprep.subr.bf16.mxu0 0
        %466 = vmatpush1.bf16.msra.mxu0 %v434
        %467 = vmatprep.subr.bf16.mxu0 0
        %468 = vmatpush1.bf16.msra.mxu0 %v433
        %469 = vmatprep.subr.bf16.mxu0 0
        %470 = vmatpush1.bf16.msra.mxu0 %v432
        %471 = vmatprep.subr.bf16.mxu0 0
        %472 = vmatpush1.bf16.msra.mxu0 %v431
        %473 = vmatprep.subr.bf16.mxu0 0
        %474 = vmatpush1.bf16.msra.mxu0 %v430
        %475 = vmatprep.subr.bf16.mxu0 0
        %476 = vmatpush1.bf16.msra.mxu0 %v429
        %477 = vmatprep.subr.bf16.mxu0 0
        %478 = vmatpush2.bf16.msra.mxu0 %v444
        %479 = vmatprep.subr.bf16.mxu0 0
        %480 = vmatpush2.bf16.msra.mxu0 %v443
        %481 = vmatprep.subr.bf16.mxu0 0
        %482 = vmatpush2.bf16.msra.mxu0 %v442
        %483 = vmatprep.subr.bf16.mxu0 0
        %484 = vmatpush2.bf16.msra.mxu0 %v441
        %485 = vmatprep.subr.bf16.mxu0 0
        %486 = vmatpush2.bf16.msra.mxu0 %v440
        %487 = vmatprep.subr.bf16.mxu0 0
        %488 = vmatpush2.bf16.msra.mxu0 %v439
        %489 = vmatprep.subr.bf16.mxu0 0
        %490 = vmatpush2.bf16.msra.mxu0 %v438
        %491 = vmatprep.subr.bf16.mxu0 0
        %492 = vmatpush2.bf16.msra.mxu0 %v437
        %493 = vmatprep.mubr.bf16.mxu0 %v311
        %494 = vmatmul.mubr.bf16.gmra.mxu0 %v310
        %v495 = vpop.f32.mrf.mxu0
        %v496 = vadd.f32 %v363, %v495
        %v497 = vpop.f32.mrf.mxu0
        %v498 = vpop.f32.mrf.mxu0
        %v499 = vadd.f32 %v363, %v498
        %v500 = vpop.f32.mrf.mxu0
        %501 = vmatprep.mubr.bf16.mxu0 %v313
        %502 = vmatmul.mubr.bf16.gmra.mxu0 %v312
        %v503 = vpop.f32.mrf.mxu0
        %v504 = vadd.f32 %v363, %v503
        %v505 = vpop.f32.mrf.mxu0
        %v506 = vpop.f32.mrf.mxu0
        %v507 = vadd.f32 %v363, %v506
        %v508 = vpop.f32.mrf.mxu0
        %509 = vmatprep.mubr.bf16.mxu0 %v315
        %510 = vmatmul.mubr.bf16.gmra.mxu0 %v314
        %v511 = vpop.f32.mrf.mxu0
        %v512 = vadd.f32 %v363, %v511
        %v513 = vpop.f32.mrf.mxu0
        %v514 = vpop.f32.mrf.mxu0
        %v515 = vadd.f32 %v363, %v514
        %v516 = vpop.f32.mrf.mxu0
        %517 = vmatprep.mubr.bf16.mxu0 %v317
        %518 = vmatmul.mubr.bf16.gmra.mxu0 %v316
        %v519 = vpop.f32.mrf.mxu0
        %v520 = vadd.f32 %v363, %v519
        %v521 = vpop.f32.mrf.mxu0
        %v522 = vpop.f32.mrf.mxu0
        %v523 = vadd.f32 %v363, %v522
        %v524 = vpop.f32.mrf.mxu0
        %525 = vmatprep.mubr.bf16.mxu0 %v319
        %526 = vmatmul.mubr.bf16.gmra.mxu0 %v318
        %v527 = vpop.f32.mrf.mxu0
        %v528 = vadd.f32 %v363, %v527
        %v529 = vpop.f32.mrf.mxu0
        %v530 = vpop.f32.mrf.mxu0
        %v531 = vadd.f32 %v363, %v530
        %v532 = vpop.f32.mrf.mxu0
        %533 = vmatprep.mubr.bf16.mxu0 %v321
        %534 = vmatmul.mubr.bf16.gmra.mxu0 %v320
        %v535 = vpop.f32.mrf.mxu0
        %v536 = vadd.f32 %v363, %v535
        %v537 = vpop.f32.mrf.mxu0
        %v538 = vpop.f32.mrf.mxu0
        %v539 = vadd.f32 %v363, %v538
        %v540 = vpop.f32.mrf.mxu0
        %541 = vmatprep.mubr.bf16.mxu0 %v323
        %542 = vmatmul.mubr.bf16.gmra.mxu0 %v322
        %v543 = vpop.f32.mrf.mxu0
        %v544 = vadd.f32 %v363, %v543
        %v545 = vpop.f32.mrf.mxu0
        %v546 = vpop.f32.mrf.mxu0
        %v547 = vadd.f32 %v363, %v546
        %v548 = vpop.f32.mrf.mxu0
        %549 = vmatprep.mubr.bf16.mxu0 %v325
        %550 = vmatmul.mubr.bf16.gmra.mxu0 %v324
        %v551 = vpop.f32.mrf.mxu0
        %v552 = vadd.f32 %v363, %v551
        %v553 = vpop.f32.mrf.mxu0
        %v554 = vpop.f32.mrf.mxu0
        %v555 = vadd.f32 %v363, %v554
        %v556 = vpop.f32.mrf.mxu0
        %557 = vdwg.mxu0
        %v558 = vld [vmem:[%s4] sm:$0x1]
        %v560 = vlaneseq
        %v561 = vshrl.u32 %v560, 7
        %v562 = vsub.s32 0, %v561
        %v563 = vrot.slane %v558, %v562
        %v565 = vmul.f32 %v496, %v563
        %v566 = vmul.f32 %v499, %v563
        %v567 = vmul.f32 %v504, %v563
        %v568 = vmul.f32 %v507, %v563
        %v569 = vmul.f32 %v512, %v563
        %v570 = vmul.f32 %v515, %v563
        %v571 = vmul.f32 %v520, %v563
        %v572 = vmul.f32 %v523, %v563
        %v573 = vmul.f32 %v528, %v563
        %v574 = vmul.f32 %v531, %v563
        %v575 = vmul.f32 %v536, %v563
        %v576 = vmul.f32 %v539, %v563
        %v577 = vmul.f32 %v544, %v563
        %v578 = vmul.f32 %v547, %v563
        %v579 = vmul.f32 %v552, %v563
        %v580 = vmul.f32 %v555, %v563
        %v581 = vld [vmem:[%s262] sm:$0xff]
        %v582 = vld [vmem:[%s262 + $0x8] sm:$0xff]
        %v583 = vld [vmem:[%s262 + $0x10] sm:$0xff]
        %v584 = vld [vmem:[%s262 + $0x18] sm:$0xff]
        %v585 = vld [vmem:[%s262 + $0x20] sm:$0xff]
        %v586 = vld [vmem:[%s262 + $0x28] sm:$0xff]
        %v587 = vld [vmem:[%s262 + $0x30] sm:$0xff]
        %v588 = vld [vmem:[%s262 + $0x38] sm:$0xff]
        %v589 = vld [vmem:[%s262 + $0x40] sm:$0xff]
        %v590 = vld [vmem:[%s262 + $0x48] sm:$0xff]
        %v591 = vld [vmem:[%s262 + $0x50] sm:$0xff]
        %v592 = vld [vmem:[%s262 + $0x58] sm:$0xff]
        %v593 = vld [vmem:[%s262 + $0x60] sm:$0xff]
        %v594 = vld [vmem:[%s262 + $0x68] sm:$0xff]
        %v595 = vld [vmem:[%s262 + $0x70] sm:$0xff]
        %v596 = vld [vmem:[%s262 + $0x78] sm:$0xff]
        %v597 = vadd.f32 %v565, %v581
        %v598 = vadd.f32 %v566, %v582
        %v599 = vadd.f32 %v567, %v583
        %v600 = vadd.f32 %v568, %v584
        %v601 = vadd.f32 %v569, %v585
        %v602 = vadd.f32 %v570, %v586
        %v603 = vadd.f32 %v571, %v587
        %v604 = vadd.f32 %v572, %v588
        %v605 = vadd.f32 %v573, %v589
        %v606 = vadd.f32 %v574, %v590
        %v607 = vadd.f32 %v575, %v591
        %v608 = vadd.f32 %v576, %v592
        %v609 = vadd.f32 %v577, %v593
        %v610 = vadd.f32 %v578, %v594
        %v611 = vadd.f32 %v579, %v595
        %v612 = vadd.f32 %v580, %v596
        %613 = vst [vmem:[%s297] sm:$0xff] %v597
        %614 = vst [vmem:[%s297 + $0x8] sm:$0xff] %v598
        %615 = vst [vmem:[%s297 + $0x10] sm:$0xff] %v599
        %616 = vst [vmem:[%s297 + $0x18] sm:$0xff] %v600
        %617 = vst [vmem:[%s297 + $0x20] sm:$0xff] %v601
        %618 = vst [vmem:[%s297 + $0x28] sm:$0xff] %v602
        %619 = vst [vmem:[%s297 + $0x30] sm:$0xff] %v603
        %620 = vst [vmem:[%s297 + $0x38] sm:$0xff] %v604
        %621 = vst [vmem:[%s297 + $0x40] sm:$0xff] %v605
        %622 = vst [vmem:[%s297 + $0x48] sm:$0xff] %v606
        %623 = vst [vmem:[%s297 + $0x50] sm:$0xff] %v607
        %624 = vst [vmem:[%s297 + $0x58] sm:$0xff] %v608
        %625 = vst [vmem:[%s297 + $0x60] sm:$0xff] %v609
        %626 = vst [vmem:[%s297 + $0x68] sm:$0xff] %v610
        %627 = vst [vmem:[%s297 + $0x70] sm:$0xff] %v611
        %628 = vst [vmem:[%s297 + $0x78] sm:$0xff] %v612
        %s629 = sand.u32 %s148, 1
        %s630 = scalar_lea.sflag [#allocation4], %s629
        %s631 = sand.u32 %s148, 1
        %s632 = smul.addr %s631, 128
        %s633 = scalar_lea.vmem [#allocation8], %s632
        // Predicated region
        $region53: #{tpu_custom_call.1} parent=39 // pred_check
          %p634 = pneg %p158
        $region54: #{tpu_custom_call.1} parent=39 // pred_check_branch
          %636 = sbr.rel (%p634) target = $region56
        $region55: #{tpu_custom_call.1} parent=39 // pred_region
          %s637 = smul.u32 16, %s25
          %s639 = ssub.s32 2048, 2048
          %640 = vsyncadd %s630, %s639
          %s641 = smul.addr %s637, 128
          %s642 = scalar_lea.hbm %s5, %s641
          %s643 = sshll.u32 %s633, 4
          %s644 = int_to_ptr.vmem [resolvable:$true] %s643
          %649 = dma.vmem_to_hbm [thread:$0]  %s644, 2048, %s642, %s630, 128, 128, 8
        $region56: #{tpu_custom_call.1} parent=39 // pred_fallthru
          _
      $region40: #{tpu_custom_call.1} parent=5 // pred_fallthru
        _
      %p650 = scmp.le.s32.totalorder 2, %s20
      // Predicated region
      $region57: #{tpu_custom_call.1} parent=5 // pred_check
        %p651 = pneg %p650
      $region58: #{tpu_custom_call.1} parent=5 // pred_check_branch
        %653 = sbr.rel (%p651) target = $region60
      $region59: #{tpu_custom_call.1} parent=5 // pred_region
        %s654 = ssub.s32 %s20, 2
        // Predicated region
        $region61: #{tpu_custom_call.1} parent=59 // pred_check
          %p655 = pneg %p164
        $region62: #{tpu_custom_call.1} parent=59 // pred_check_branch
          %657 = sbr.rel (%p655) target = $region64
        $region63: #{tpu_custom_call.1} parent=59 // pred_region
          %s658 = sand.u32 %s149, 1
          %s659 = scalar_lea.sflag [#allocation4], %s658
          %s660 = sand.u32 %s149, 1
          %s661 = smul.addr %s660, 128
          %s662 = scalar_lea.vmem [#allocation8], %s661
          %663 = dma.done %s659, 2048
        $region64: #{tpu_custom_call.1} parent=59 // pred_fallthru
          _
      $region60: #{tpu_custom_call.1} parent=5 // pred_fallthru
        _
    $region6: #{tpu_custom_call.1} parent=1 // loop_footer
      %s24 = sadd.s32 1, %s20
    $region7: #{tpu_custom_call.1} parent=1 // loop_footer_branch
      %19 = sbr.rel target = $region3
    $region8: #{tpu_custom_call.1} parent=1 // loop_exit
      _
    %664 = vsyncpa [#allocation3], 1
    %s665 = scalar_lea.sflag [#allocation3], 1
    %666 = vsyncpa %s665, 1
    %667 = vsyncpa [#allocation6], 1
    %s668 = scalar_lea.sflag [#allocation6], 1
    %669 = vsyncpa %s668, 1
    %670 = vsyncpa [#allocation4], 1
    %s671 = scalar_lea.sflag [#allocation4], 1
    %672 = vsyncpa %s671, 1

</llo_original>
